<compile_context>
chip_gen: v7x
topology: tpu7x:2x2x1
jax: 0.10.0
libtpu: 0.0.40
codegen_flags: <defaults>
</compile_context>

<pallas_src>
import functools
import math

import jax
import jax.numpy as jnp
from jax import lax
from jax.experimental import pallas as pl
from jax.experimental.pallas import tpu as pltpu


# ----------------------------------------------------------------------------
# Small helpers: tile selection, generation-aware defaults
# ----------------------------------------------------------------------------
def _round_up(x, m):
    return ((x + m - 1) // m) * m


def _pick_tile(n, target, align):
    """Return (tile, padded_n).  tile <= target, tile % align == 0 (or tile == n
    when n <= target); padded_n is n rounded up so tile divides it."""
    if n <= target:
        return n, n
    t = (target // align) * align
    while t >= align:
        if n % t == 0:
            return t, n
        t -= align
    t = (target // align) * align         # no aligned divisor: pad instead of full dim
    return t, _round_up(n, t)


@functools.lru_cache(maxsize=1)
def _device_kind():
    try:
        return jax.devices()[0].device_kind.lower()
    except Exception:  # pragma: no cover - CPU / interpret fallback
        return ""


def _vmem_limit_bytes():
    kind = _device_kind()
    if ("v5" in kind) or ("v6" in kind):
        return 64 * 1024 * 1024          # 128 MiB physical -> safe headroom
    return None                          # v7x (64 MiB) / unknown: compiler default


def _default_tq_target():
    return 256 if "v7" in _device_kind() else 512


# ----------------------------------------------------------------------------
# Kernel 1: tiled linear  y = x @ W + b   (bf16 MXU operands, f32 accumulation)
# ----------------------------------------------------------------------------
def _linear_kernel(x_ref, w_ref, b_ref, o_ref, acc_ref, *, cdt):
    @pl.when(pl.program_id(2) == 0)
    def _():
        acc_ref[...] = jnp.zeros_like(acc_ref)

    acc_ref[...] += jnp.dot(x_ref[...].astype(cdt), w_ref[...].astype(cdt),
                            preferred_element_type=jnp.float32)

    @pl.when(pl.program_id(2) == pl.num_programs(2) - 1)
    def _():
        o_ref[...] = (acc_ref[...] + b_ref[...]).astype(o_ref.dtype)


def linear(x2d, w, b, *, compute_dtype=jnp.bfloat16, out_dtype=jnp.float32,
           tm=256, tn=256, tk=512):
    M, K = x2d.shape
    Kw, Nout = w.shape
    assert K == Kw
    tm, Mp = _pick_tile(M, tm, 8)
    tn, Np = _pick_tile(Nout, tn, 128)
    tk, Kp = _pick_tile(K, tk, 128)
    if (Mp, Kp) != (M, K):
        x2d = jnp.pad(x2d, ((0, Mp - M), (0, Kp - K)))
    if (Kp, Np) != (K, Nout):
        w = jnp.pad(w, ((0, Kp - K), (0, Np - Nout)))
    if Np != Nout:
        b = jnp.pad(b, (0, Np - Nout))

    kern = functools.partial(_linear_kernel, cdt=compute_dtype)
    out = pl.pallas_call(
        kern,
        out_shape=jax.ShapeDtypeStruct((Mp, Np), out_dtype),
        grid=(Mp // tm, Np // tn, Kp // tk),
        in_specs=[
            pl.BlockSpec((tm, tk), lambda i, j, kk: (i, kk)),
            pl.BlockSpec((tk, tn), lambda i, j, kk: (kk, j)),
            pl.BlockSpec((1, tn), lambda i, j, kk: (0, j)),
        ],
        out_specs=pl.BlockSpec((tm, tn), lambda i, j, kk: (i, j)),
        scratch_shapes=[pltpu.VMEM((tm, tn), jnp.float32)],
        compiler_params=pltpu.CompilerParams(
            dimension_semantics=("parallel", "parallel", "arbitrary"),
            vmem_limit_bytes=_vmem_limit_bytes()),
    )(x2d, w, b.reshape(1, Np))
    if (Mp, Np) != (M, Nout):
        out = out[:M, :Nout]
    return out


# ----------------------------------------------------------------------------
# Kernel 2: depthwise conv (stride 1, 'same') + LayerNorm + exact GELU, fused
# ----------------------------------------------------------------------------
def _dw_conv_ln_gelu_kernel(x_ref, w_ref, b_ref, g_ref, beta_ref, o_ref, *, k, H, W, eps):
    xp = x_ref[...]                                       # (H+2p, W+2p, C)
    C = xp.shape[-1]
    acc = jnp.zeros((H, W, C), jnp.float32) + b_ref[...]  # bias (1, C) broadcasts
    for kh in range(k):
        for kw in range(k):
            acc = acc + xp[kh:kh + H, kw:kw + W, :] * w_ref[kh * k + kw, :]
    # LayerNorm over channels (biased variance, like torch.nn.LayerNorm)
    mean = jnp.mean(acc, axis=-1, keepdims=True)
    var = jnp.mean((acc - mean) ** 2, axis=-1, keepdims=True)
    y = (acc - mean) * lax.rsqrt(var + eps)
    y = y * g_ref[...] + beta_ref[...]
    # exact GELU (torch.nn.GELU default)
    y = 0.5 * y * (1.0 + lax.erf(y * 0.7071067811865476))
    o_ref[...] = y.astype(o_ref.dtype)


def dw_conv_ln_gelu(x_nhwc, w_dw, b_dw, gamma, beta, *, k, eps=1e-6,
                    out_dtype=jnp.float32):
    N, H, W, C = x_nhwc.shape
    p = (k - 1) // 2
    xp = jnp.pad(x_nhwc, ((0, 0), (p, p), (p, p), (0, 0)))
    Hp, Wp = H + 2 * p, W + 2 * p
    kern = functools.partial(_dw_conv_ln_gelu_kernel, k=k, H=H, W=W, eps=eps)
    return pl.pallas_call(
        kern,
        out_shape=jax.ShapeDtypeStruct((N, H, W, C), out_dtype),
        grid=(N,),
        in_specs=[
            pl.BlockSpec((None, Hp, Wp, C), lambda n: (n, 0, 0, 0)),
            pl.BlockSpec((k * k, C), lambda n: (0, 0)),
            pl.BlockSpec((1, C), lambda n: (0, 0)),
            pl.BlockSpec((1, C), lambda n: (0, 0)),
            pl.BlockSpec((1, C), lambda n: (0, 0)),
        ],
        out_specs=pl.BlockSpec((None, H, W, C), lambda n: (n, 0, 0, 0)),
        compiler_params=pltpu.CompilerParams(
            dimension_semantics=("parallel",),
            vmem_limit_bytes=_vmem_limit_bytes()),
    )(xp, w_dw, b_dw.reshape(1, C), gamma.reshape(1, C), beta.reshape(1, C))


# ----------------------------------------------------------------------------
# Kernel 3: fused DCNv3 core.
#   inputs per (n, q-tile, hw-tile) grid step:
#     base_ref : (tq, BW)   f32   [base_x(P) | base_y(P) | 0-pad]   (query only)
#     om_ref   : (tq, OMW)  f32   [off_x(G*P) | off_y(G*P) | mask(G*P) | 0-pad]
#     x_ref    : (thw, C)   value window (bf16/f32)
#   output o_ref : (tq, C); f32 accumulator scratch across the hw axis.
# Sampling coords are pixel coords in the UNPADDED frame; OOB corners get zero
# weight (== grid_sample(padding_mode='zeros') on the zero-padded value).
# ----------------------------------------------------------------------------
def _dcn_core_kernel(base_ref, om_ref, x_ref, o_ref, acc_ref, *, H, W, G, P, gc, cdt):
    hw_i = pl.program_id(2)
    thw = x_ref.shape[0]

    @pl.when(hw_i == 0)
    def _():
        acc_ref[...] = jnp.zeros_like(acc_ref)

    xa = x_ref[...].astype(cdt)                 # (thw, C), no-op cast when already cdt
    om = om_ref[...]                            # (tq, OMW) f32
    bx = base_ref[:, 0:P]                       # (tq, P) f32
    by = base_ref[:, P:2 * P]
    tq = om.shape[0]
    GP = G * P
    iota = hw_i * thw + lax.broadcasted_iota(jnp.int32, (1, thw), 1)   # global pixel idx
    zero_col = jnp.zeros((tq, 1), cdt)

    for g in range(G):
        off_x = om[:, g * P:(g + 1) * P]
        off_y = om[:, GP + g * P:GP + (g + 1) * P]
        ml = om[:, 2 * GP + g * P:2 * GP + (g + 1) * P]
        px = bx + off_x                         # offset_scale folded into the weights
        py = by + off_y

        # softmax over the P sampling points of this group (kept in f32)
        mmax = jnp.max(ml, axis=-1, keepdims=True)
        mexp = jnp.exp(ml - mmax)
        msk = mexp / jnp.sum(mexp, axis=-1, keepdims=True)

        x0 = jnp.floor(px)
        y0 = jnp.floor(py)
        tx = px - x0
        ty = py - y0

        S = jnp.zeros((tq, thw), cdt)
        for dy in (0, 1):
            for dx in (0, 1):
                cx = x0 + dx
                cy = y0 + dy
                wgt = (tx if dx else 1.0 - tx) * (ty if dy else 1.0 - ty)
                valid = (cx >= 0) & (cx <= W - 1) & (cy >= 0) & (cy <= H - 1)
                wgt = (jnp.where(valid, wgt, 0.0) * msk).astype(cdt)     # (tq, P)
                idx = (jnp.clip(cy.astype(jnp.int32), 0, H - 1) * W
                       + jnp.clip(cx.astype(jnp.int32), 0, W - 1))       # (tq, P)
                for p in range(P):
                    # fused select-accumulate (no bool->f32 convert, no extra mul)
                    S = S + jnp.where(iota == idx[:, p:p + 1],
                                      wgt[:, p:p + 1], zero_col)

        part = jnp.dot(S, xa[:, g * gc:(g + 1) * gc],
                       preferred_element_type=jnp.float32)               # (tq, gc)
        acc_ref[:, g * gc:(g + 1) * gc] += part

    @pl.when(hw_i == pl.num_programs(2) - 1)
    def _():
        o_ref[...] = acc_ref[...].astype(o_ref.dtype)


def dcn_core(xv, om, base, *, H, W, G, P, compute_dtype=jnp.bfloat16,
             out_dtype=jnp.float32, tq_target=None, thw_target=2048):
    N, HW, C = xv.shape
    _, HoWo, OMW = om.shape
    BW = base.shape[1]
    assert HW == H * W and C % G == 0
    assert OMW >= 3 * G * P and BW >= 2 * P
    gc = C // G
    if tq_target is None:
        tq_target = _default_tq_target()

    tq, HoWo_p = _pick_tile(HoWo, tq_target, 8)
    thw, HW_p = _pick_tile(HW, thw_target, 8)
    if HoWo_p != HoWo:
        om = jnp.pad(om, ((0, 0), (0, HoWo_p - HoWo), (0, 0)))
        base = jnp.pad(base, ((0, HoWo_p - HoWo), (0, 0)))
    if HW_p != HW:
        xv = jnp.pad(xv, ((0, 0), (0, HW_p - HW), (0, 0)))

    kern = functools.partial(_dcn_core_kernel, H=H, W=W, G=G, P=P, gc=gc,
                             cdt=compute_dtype)
    out = pl.pallas_call(
        kern,
        out_shape=jax.ShapeDtypeStruct((N, HoWo_p, C), out_dtype),
        grid=(N, HoWo_p // tq, HW_p // thw),
        in_specs=[
            pl.BlockSpec((tq, BW), lambda n, q, h: (q, 0)),
            pl.BlockSpec((None, tq, OMW), lambda n, q, h: (n, q, 0)),
            pl.BlockSpec((None, thw, C), lambda n, q, h: (n, h, 0)),
        ],
        out_specs=pl.BlockSpec((None, tq, C), lambda n, q, h: (n, q, 0)),
        scratch_shapes=[pltpu.VMEM((tq, C), jnp.float32)],
        compiler_params=pltpu.CompilerParams(
            dimension_semantics=("parallel", "parallel", "arbitrary"),
            vmem_limit_bytes=_vmem_limit_bytes()),
    )(base, om, xv)
    if HoWo_p != HoWo:
        out = out[:, :HoWo]
    return out


# ----------------------------------------------------------------------------
# Full DCNv3 forward (glue in plain JAX; hot paths in the kernels above)
# ----------------------------------------------------------------------------
def dcnv3_forward(inp, params, cfg, *, compute_dtype=jnp.bfloat16):
    N, H, W, C = inp.shape
    k = cfg["kernel_size"]
    G = cfg["group"]
    stride = cfg["stride"]
    pad = cfg["pad"]
    dil = cfg["dilation"]
    offset_scale = cfg["offset_scale"]
    P = k * k
    GP = G * P
    f32 = jnp.float32
    cdt = compute_dtype

    H_in, W_in = H + 2 * pad, W + 2 * pad            # padded frame used for normalization
    H_out = (H_in - (dil * (k - 1) + 1)) // stride + 1
    W_out = (W_in - (dil * (k - 1) + 1)) // stride + 1
    # offset/mask are predicted on the (H, W) grid; the reference module only
    # broadcasts correctly when the sampling grid matches it.
    assert (H_out, W_out) == (H, W), "DCNv3_pytorch requires H_out == H and W_out == W"
    HoWo = H_out * W_out

    # pre-cast MXU weights once (halves weight DMA, removes in-kernel casts)
    w_in = params["w_in"].astype(cdt)
    w_out = params["w_out"].astype(cdt)

    # input projection (value tensor) -> compute dtype (consumed only by the MXU)
    x2d = inp.reshape(N * H * W, C)
    x_proj = linear(x2d, w_in, params["b_in"], compute_dtype=cdt, out_dtype=cdt)

    # depthwise conv + LN + GELU -> compute dtype (consumed only by the om matmul)
    x1 = dw_conv_ln_gelu(inp, params["w_dw"], params["b_dw"], params["ln_g"],
                         params["ln_b"], k=cfg["dw_kernel_size"], out_dtype=cdt)
    x1_2d = x1.reshape(N * H * W, C)

    # fused offset+mask projection: columns reordered to [off_x | off_y | mask],
    # offset_scale folded into the offset columns, width padded to a 128 multiple
    # so the output stores are lane-dense and the DCN core can consume it directly.
    OMW = _round_up(3 * GP, 128)
    w_off, b_off = params["w_off"], params["b_off"]     # xy-interleaved columns
    w_om = jnp.zeros((C, OMW), f32)
    w_om = w_om.at[:, 0:GP].set(w_off[:, 0::2] * offset_scale)
    w_om = w_om.at[:, GP:2 * GP].set(w_off[:, 1::2] * offset_scale)
    w_om = w_om.at[:, 2 * GP:3 * GP].set(params["w_msk"])
    b_om = jnp.zeros((OMW,), f32)
    b_om = b_om.at[0:GP].set(b_off[0::2] * offset_scale)
    b_om = b_om.at[GP:2 * GP].set(b_off[1::2] * offset_scale)
    b_om = b_om.at[2 * GP:3 * GP].set(params["b_msk"])
    om = linear(x1_2d, w_om.astype(cdt), b_om, compute_dtype=cdt, out_dtype=f32)
    om = om.reshape(N, HoWo, OMW)

    # per-query base sampling coordinates (pixel coords in the UNPADDED frame):
    #   px = base_x[q, p] + offset_x * offset_scale  (offset_scale already folded)
    # grid_sample(align_corners=False): pixel = norm*size - 0.5 (padded frame),
    # then shift by -pad to sample the unpadded value (no F.pad / HBM copy).
    base0 = (dil * (k - 1)) // 2 + 0.5
    ref_y = base0 + jnp.arange(H_out, dtype=f32) * stride     # already *H_in/W_in scale
    ref_x = base0 + jnp.arange(W_out, dtype=f32) * stride
    ry, rx = jnp.meshgrid(ref_y, ref_x, indexing="ij")
    rx_q = rx.reshape(-1)
    ry_q = ry.reshape(-1)
    off0 = float(-((dil * (k - 1)) // 2))
    lin = off0 + jnp.arange(k, dtype=f32) * dil
    lin_x = jnp.repeat(lin, k)        # point order p = i*k + j, x from i
    lin_y = jnp.tile(lin, k)          # y from j
    BW = _round_up(2 * P, 128)
    base = jnp.zeros((HoWo, BW), f32)
    base = base.at[:, 0:P].set(rx_q[:, None] + lin_x[None, :] * offset_scale - 0.5 - pad)
    base = base.at[:, P:2 * P].set(ry_q[:, None] + lin_y[None, :] * offset_scale - 0.5 - pad)

    xv = x_proj.reshape(N, H * W, C)
    out = dcn_core(xv, om, base, H=H, W=W, G=G, P=P,
                   compute_dtype=cdt, out_dtype=cdt)

    # TODO(synk): center_feature_scale branch not implemented (module default False).
    y = linear(out.reshape(N * HoWo, C), w_out, params["b_out"],
               compute_dtype=cdt, out_dtype=f32)
    return y.reshape(N, H_out, W_out, C)


# ----------------------------------------------------------------------------
# Pure-JAX references (sanity checks)
# ----------------------------------------------------------------------------
def dw_conv_ln_gelu_ref(x, w_dw, b_dw, gamma, beta, *, k, eps=1e-6):
    N, H, W, C = x.shape
    rhs = w_dw.reshape(k, k, 1, C)
    y = lax.conv_general_dilated(
        x, rhs, window_strides=(1, 1), padding="SAME",
        dimension_numbers=("NHWC", "HWIO", "NHWC"),
        feature_group_count=C, precision=lax.Precision.HIGHEST)
    y = y + b_dw
    mean = jnp.mean(y, axis=-1, keepdims=True)
    var = jnp.mean((y - mean) ** 2, axis=-1, keepdims=True)
    y = (y - mean) * lax.rsqrt(var + eps) * gamma + beta
    return 0.5 * y * (1.0 + lax.erf(y * 0.7071067811865476))


def dcn_core_ref(xv, px, py, mlog, *, H, W, G):
    N, HoWo, GP = mlog.shape
    C = xv.shape[-1]
    P = GP // G
    gc = C // G
    xng = xv.reshape(N, H * W, G, gc).transpose(0, 2, 1, 3)     # (N,G,HW,gc)
    pxg = px.reshape(N, HoWo, G, P).transpose(0, 2, 1, 3)       # (N,G,HoWo,P)
    pyg = py.reshape(N, HoWo, G, P).transpose(0, 2, 1, 3)
    msk = jax.nn.softmax(mlog.reshape(N, HoWo, G, P).transpose(0, 2, 1, 3), axis=-1)
    x0 = jnp.floor(pxg)
    y0 = jnp.floor(pyg)
    out = jnp.zeros((N, G, HoWo, gc), jnp.float32)
    for dy in (0, 1):
        for dx in (0, 1):
            cx = x0 + dx
            cy = y0 + dy
            w = (((pxg - x0) if dx else (1.0 - (pxg - x0)))
                 * ((pyg - y0) if dy else (1.0 - (pyg - y0))))
            valid = (cx >= 0) & (cx <= W - 1) & (cy >= 0) & (cy <= H - 1)
            w = jnp.where(valid, w, 0.0) * msk
            idx = (jnp.clip(cy.astype(jnp.int32), 0, H - 1) * W
                   + jnp.clip(cx.astype(jnp.int32), 0, W - 1))
            idx_e = jnp.broadcast_to(idx.reshape(N, G, HoWo * P, 1), (N, G, HoWo * P, gc))
            vals = jnp.take_along_axis(xng, idx_e, axis=2).reshape(N, G, HoWo, P, gc)
            out = out + (w[..., None] * vals).sum(axis=3)
    return out.transpose(0, 2, 1, 3).reshape(N, HoWo, C)


# ----------------------------------------------------------------------------
# Deterministic parameter init + test
# ----------------------------------------------------------------------------
def make_params(key, C, G, k):
    ks = jax.random.split(key, 8)

    def xavier(kk, shape):
        bound = math.sqrt(6.0 / (shape[0] + shape[1]))
        return jax.random.uniform(kk, shape, jnp.float32, -bound, bound)

    P = k * k
    # NOTE: the PyTorch module zero-inits offset/mask projections; here we use
    # small deterministic random values so the deformable sampling is exercised.
    return {
        "w_in": xavier(ks[0], (C, C)), "b_in": jnp.zeros((C,), jnp.float32),
        "w_out": xavier(ks[1], (C, C)), "b_out": jnp.zeros((C,), jnp.float32),
        "w_off": 0.05 * jax.random.normal(ks[2], (C, G * P * 2), jnp.float32),
        "b_off": 0.05 * jax.random.normal(ks[3], (G * P * 2,), jnp.float32),
        "w_msk": 0.05 * jax.random.normal(ks[4], (C, G * P), jnp.float32),
        "b_msk": 0.05 * jax.random.normal(ks[5], (G * P,), jnp.float32),
        "w_dw": 0.1 * jax.random.normal(ks[6], (k * k, C), jnp.float32),
        "b_dw": 0.1 * jax.random.normal(ks[7], (C,), jnp.float32),
        "ln_g": jnp.ones((C,), jnp.float32),
        "ln_b": jnp.zeros((C,), jnp.float32),
    }


if __name__ == "__main__":
    key = jax.random.PRNGKey(0)
    k_in, k_par, k_chk = jax.random.split(key, 3)

    cfg = dict(kernel_size=3, dw_kernel_size=3, stride=1, pad=1, dilation=1,
               group=4, offset_scale=1.0)
    N, H, W, C = 2, 8, 8, 32   # small shapes, channels % group == 0

    params = make_params(k_par, C, cfg["group"], cfg["kernel_size"])
    x = jax.random.normal(k_in, (N, H, W, C), jnp.float32)

    out = jax.block_until_ready(dcnv3_forward(x, params, cfg))
    assert out.shape == (N, H, W, C)
    assert bool(jnp.all(jnp.isfinite(out)))

    # --- check 1: tiled linear (f32 path) vs XLA reference ------------------
    ka, kb = jax.random.split(k_chk)
    a = jax.random.normal(ka, (128, 32), jnp.float32)
    wt = 0.1 * jax.random.normal(kb, (32, 96), jnp.float32)
    bt = jnp.linspace(-1.0, 1.0, 96, dtype=jnp.float32)
    got = jax.block_until_ready(linear(a, wt, bt, compute_dtype=jnp.float32))
    want = jnp.dot(a, wt, precision=lax.Precision.HIGHEST) + bt
    err = float(jnp.max(jnp.abs(got - want)))
    assert err < 2e-3, f"linear mismatch: {err}"

    # --- check 2: depthwise conv + LN + GELU vs XLA reference ---------------
    got = jax.block_until_ready(
        dw_conv_ln_gelu(x, params["w_dw"], params["b_dw"], params["ln_g"],
                        params["ln_b"], k=cfg["dw_kernel_size"]))
    want = dw_conv_ln_gelu_ref(x, params["w_dw"], params["b_dw"], params["ln_g"],
                               params["ln_b"], k=cfg["dw_kernel_size"])
    err = float(jnp.max(jnp.abs(got - want)))
    assert err < 1e-3, f"dw conv mismatch: {err}"

    # --- check 3: fused DCN core (f32 path) vs pure-JAX gather reference ----
    kk = jax.random.split(k_chk, 5)
    Nt, Ht, Wt, Gt, gct, HoWot, Pt = 1, 6, 6, 2, 8, 16, 9
    Ct = Gt * gct
    GPt = Gt * Pt
    xv_t = jax.random.normal(kk[0], (Nt, Ht * Wt, Ct), jnp.float32)
    px_t = jax.random.uniform(kk[1], (Nt, HoWot, GPt), jnp.float32, -1.5, Wt + 0.5)
    py_t = jax.random.uniform(kk[2], (Nt, HoWot, GPt), jnp.float32, -1.5, Ht + 0.5)
    ml_t = jax.random.normal(kk[3], (Nt, HoWot, GPt), jnp.float32)
    # pack the fused kernel inputs: om = [off_x | off_y | mask | pad], base = 0
    OMWt = _round_up(3 * GPt, 128)
    om_t = jnp.zeros((Nt, HoWot, OMWt), jnp.float32)
    om_t = om_t.at[..., 0:GPt].set(px_t)
    om_t = om_t.at[..., GPt:2 * GPt].set(py_t)
    om_t = om_t.at[..., 2 * GPt:3 * GPt].set(ml_t)
    base_t = jnp.zeros((HoWot, _round_up(2 * Pt, 128)), jnp.float32)
    got = jax.block_until_ready(
        dcn_core(xv_t, om_t, base_t, H=Ht, W=Wt, G=Gt, P=Pt,
                 compute_dtype=jnp.float32, out_dtype=jnp.float32))
    want = dcn_core_ref(xv_t, px_t, py_t, ml_t, H=Ht, W=Wt, G=Gt)
    err = float(jnp.max(jnp.abs(got - want)))
    assert err < 5e-4, f"dcn core mismatch: {err}"

    print("KERNEL_OK")
</pallas_src>

<mosaic_0001>
module attributes {stable_mosaic.version = 11 : i64} {
  func.func @_linear_kernel(%arg0: i32, %arg1: i32, %arg2: i32, %arg3: memref<128x32xf32, #tpu.memory_space<vmem>>, %arg4: memref<32x32xbf16, #tpu.memory_space<vmem>>, %arg5: memref<1x32xf32, #tpu.memory_space<vmem>>, %arg6: memref<128x32xbf16, #tpu.memory_space<vmem>>, %arg7: memref<128x32xf32, #tpu.memory_space<vmem>>) attributes {dimension_semantics = [#tpu.dimension_semantics<parallel>, #tpu.dimension_semantics<parallel>, #tpu.dimension_semantics<arbitrary>], iteration_bounds = array<i64: 1, 1, 1>, scalar_prefetch = 0 : i64, scratch_operands = 1 : i64, tpu.core_type = #tpu.core_type<tc>, window_params = [{transform_indices = @transform_0, window_bounds = array<i64: 128, 32>}, {transform_indices = @transform_1, window_bounds = array<i64: 32, 32>}, {transform_indices = @transform_2, window_bounds = array<i64: 1, 32>}, {transform_indices = @transform_3, window_bounds = array<i64: 128, 32>}]} {
    %c0_i32 = arith.constant 0 : i32
    %0 = arith.cmpi eq, %arg2, %c0_i32 : i32
    %1 = arith.extui %0 : i1 to i32
    %c0_i32_0 = arith.constant 0 : i32
    %2 = arith.cmpi ne, %1, %c0_i32_0 : i32
    scf.if %2 {
      %cst_10 = arith.constant 0.000000e+00 : f32
      %13 = vector.broadcast %cst_10 : f32 to vector<128x32xf32>
      %c0_11 = arith.constant 0 : index
      %c0_12 = arith.constant 0 : index
      %14 = vector.load %arg7[%c0_11, %c0_12] : memref<128x32xf32, #tpu.memory_space<vmem>>, vector<128x32xf32>
      tpu.vector_store %arg7[%c0_11, %c0_12], %13 {strides = array<i32>} : memref<128x32xf32, #tpu.memory_space<vmem>>, vector<128x32xf32>,
    } else {
    }
    %c0 = arith.constant 0 : index
    %c0_1 = arith.constant 0 : index
    %3 = vector.load %arg7[%c0, %c0_1] : memref<128x32xf32, #tpu.memory_space<vmem>>, vector<128x32xf32>
    %c0_2 = arith.constant 0 : index
    %c0_3 = arith.constant 0 : index
    %4 = vector.load %arg3[%c0_2, %c0_3] : memref<128x32xf32, #tpu.memory_space<vmem>>, vector<128x32xf32>
    %5 = arith.truncf %4 : vector<128x32xf32> to vector<128x32xbf16>
    %c0_4 = arith.constant 0 : index
    %c0_5 = arith.constant 0 : index
    %6 = vector.load %arg4[%c0_4, %c0_5] : memref<32x32xbf16, #tpu.memory_space<vmem>>, vector<32x32xbf16>
    %cst = arith.constant dense<0.000000e+00> : vector<128x32xf32>
    %7 = tpu.matmul %5, %6, %cst {dimension_numbers = #tpu.dot_dimension_numbers<[1], [0], [0], [1], [0, 0, 1, 1], [], []>} : vector<128x32xbf16>, vector<32x32xbf16>, vector<128x32xf32> -> vector<128x32xf32>
    %8 = arith.addf %3, %7 : vector<128x32xf32>
    %c0_6 = arith.constant 0 : index
    %c0_7 = arith.constant 0 : index
    %9 = vector.load %arg7[%c0_6, %c0_7] : memref<128x32xf32, #tpu.memory_space<vmem>>, vector<128x32xf32>
    tpu.vector_store %arg7[%c0_6, %c0_7], %8 {strides = array<i32>} : memref<128x32xf32, #tpu.memory_space<vmem>>, vector<128x32xf32>,
    %c0_i32_8 = arith.constant 0 : i32
    %10 = arith.cmpi eq, %arg2, %c0_i32_8 : i32
    %11 = arith.extui %10 : i1 to i32
    %c0_i32_9 = arith.constant 0 : i32
    %12 = arith.cmpi ne, %11, %c0_i32_9 : i32
    scf.if %12 {
      %c0_10 = arith.constant 0 : index
      %c0_11 = arith.constant 0 : index
      %13 = vector.load %arg7[%c0_10, %c0_11] : memref<128x32xf32, #tpu.memory_space<vmem>>, vector<128x32xf32>
      %c0_12 = arith.constant 0 : index
      %c0_13 = arith.constant 0 : index
      %14 = vector.load %arg5[%c0_12, %c0_13] : memref<1x32xf32, #tpu.memory_space<vmem>>, vector<1x32xf32>
      %15 = vector.broadcast %14 : vector<1x32xf32> to vector<128x32xf32>
      %16 = arith.addf %13, %15 : vector<128x32xf32>
      %17 = arith.truncf %16 : vector<128x32xf32> to vector<128x32xbf16>
      %c0_14 = arith.constant 0 : index
      %c0_15 = arith.constant 0 : index
      %18 = vector.load %arg6[%c0_14, %c0_15] : memref<128x32xbf16, #tpu.memory_space<vmem>>, vector<128x32xbf16>
      tpu.vector_store %arg6[%c0_14, %c0_15], %17 {strides = array<i32>} : memref<128x32xbf16, #tpu.memory_space<vmem>>, vector<128x32xbf16>,
    } else {
    }
    return
  }
  func.func @transform_0(%arg0: i32, %arg1: i32, %arg2: i32) -> (i32, i32) {
    %c0_i32 = arith.constant 0 : i32
    return %arg0, %arg2 : i32, i32
  }
  func.func @transform_1(%arg0: i32, %arg1: i32, %arg2: i32) -> (i32, i32) {
    %c0_i32 = arith.constant 0 : i32
    return %arg2, %arg1 : i32, i32
  }
  func.func @transform_2(%arg0: i32, %arg1: i32, %arg2: i32) -> (i32, i32) {
    %c0_i32 = arith.constant 0 : i32
    %c0_i32_0 = arith.constant 0 : i32
    return %c0_i32, %arg1 : i32, i32
  }
  func.func @transform_3(%arg0: i32, %arg1: i32, %arg2: i32) -> (i32, i32) {
    %c0_i32 = arith.constant 0 : i32
    return %arg0, %arg1 : i32, i32
  }
}

</mosaic_0001>

<llo_original>
// kernel: tpu_custom_call.1
$region0: #{tpu_custom_call.1}
  #allocation0 [shape = 'u32[]', space=smem, size = 0x4, offset = 0x4, fixed_abs, tag = 'smem constant byte address 0x4 - core index']
  #allocation1 [shape = 'u32[144,128]{1,0:T(1,128)}', space=vmem, size = 0x12000, scoped, tag = 'internal scratch']
  #allocation2 [shape = 'f32[128,32]{1,0:T(8,128)}', space=vmem, size = 0x10000, scoped, tag = 'scratch operand']
  %s0 = inlined_call_operand.vmem [shape: f32[128,32], index: 0, kind: input, shape index: {}]
  %s1 = inlined_call_operand.vmem [shape: bf16[32,32], index: 1, kind: input, shape index: {}]
  %s2 = inlined_call_operand.vmem [shape: f32[1,32], index: 2, kind: input, shape index: {}]
  %s3 = inlined_call_operand.vmem [shape: bf16[128,32], index: 3, kind: output, shape index: {}]
  %s4 = sld [smem:[#allocation0]]
  $region30: #{tpu_custom_call.1} parent=0
    _
  %s6 = ssub.s32 1, %s4
  %s7 = scalar_select 0, %s6, %s4
  // Predicated region
  $region2: #{tpu_custom_call.1} parent=0 // pred_check
    _
  $region3: #{tpu_custom_call.1} parent=0 // pred_check_branch
    %9 = sbr.rel (0) target = $region5
  $region4: #{tpu_custom_call.1} parent=0 // pred_region
    _
  $region5: #{tpu_custom_call.1} parent=0 // pred_fallthru
    _
  // Predicated region
  $region6: #{tpu_custom_call.1} parent=0 // pred_check
    _
  $region7: #{tpu_custom_call.1} parent=0 // pred_check_branch
    %11 = sbr.rel (0) target = $region9
  $region8: #{tpu_custom_call.1} parent=0 // pred_region
    _
  $region9: #{tpu_custom_call.1} parent=0 // pred_fallthru
    _
  // Predicated region
  $region10: #{tpu_custom_call.1} parent=0 // pred_check
    _
  $region11: #{tpu_custom_call.1} parent=0 // pred_check_branch
    %13 = sbr.rel (0) target = $region13
  $region12: #{tpu_custom_call.1} parent=0 // pred_region
    _
  $region13: #{tpu_custom_call.1} parent=0 // pred_fallthru
    _
  %p15 = scmp.eq.s32.totalorder 0, 0
  // Predicated region
  $region14: #{tpu_custom_call.1} parent=0 // pred_check
    %p16 = pneg %p15
  $region15: #{tpu_custom_call.1} parent=0 // pred_check_branch
    %18 = sbr.rel (%p16) target = $region17
  $region16: #{tpu_custom_call.1} parent=0 // pred_region
    %vm19 = vcmask 261120
    %20 = vst.msk [vmem:[#allocation2] sm:$0xff] %vm19, 0.0
    %21 = vst.msk [vmem:[#allocation2 + $0x8] sm:$0xff] %vm19, 0.0
    %22 = vst.msk [vmem:[#allocation2 + $0x10] sm:$0xff] %vm19, 0.0
    %23 = vst.msk [vmem:[#allocation2 + $0x18] sm:$0xff] %vm19, 0.0
    %24 = vst.msk [vmem:[#allocation2 + $0x20] sm:$0xff] %vm19, 0.0
    %25 = vst.msk [vmem:[#allocation2 + $0x28] sm:$0xff] %vm19, 0.0
    %26 = vst.msk [vmem:[#allocation2 + $0x30] sm:$0xff] %vm19, 0.0
    %27 = vst.msk [vmem:[#allocation2 + $0x38] sm:$0xff] %vm19, 0.0
    %28 = vst.msk [vmem:[#allocation2 + $0x40] sm:$0xff] %vm19, 0.0
    %29 = vst.msk [vmem:[#allocation2 + $0x48] sm:$0xff] %vm19, 0.0
    %30 = vst.msk [vmem:[#allocation2 + $0x50] sm:$0xff] %vm19, 0.0
    %31 = vst.msk [vmem:[#allocation2 + $0x58] sm:$0xff] %vm19, 0.0
    %32 = vst.msk [vmem:[#allocation2 + $0x60] sm:$0xff] %vm19, 0.0
    %33 = vst.msk [vmem:[#allocation2 + $0x68] sm:$0xff] %vm19, 0.0
    %34 = vst.msk [vmem:[#allocation2 + $0x70] sm:$0xff] %vm19, 0.0
    %35 = vst.msk [vmem:[#allocation2 + $0x78] sm:$0xff] %vm19, 0.0
  $region17: #{tpu_custom_call.1} parent=0 // pred_fallthru
    _
  %v36 = vld [vmem:[#allocation2] sm:$0xff]
  %v37 = vld [vmem:[#allocation2 + $0x8] sm:$0xff]
  %v38 = vld [vmem:[#allocation2 + $0x10] sm:$0xff]
  %v39 = vld [vmem:[#allocation2 + $0x18] sm:$0xff]
  %v40 = vld [vmem:[#allocation2 + $0x20] sm:$0xff]
  %v41 = vld [vmem:[#allocation2 + $0x28] sm:$0xff]
  %v42 = vld [vmem:[#allocation2 + $0x30] sm:$0xff]
  %v43 = vld [vmem:[#allocation2 + $0x38] sm:$0xff]
  %v44 = vld [vmem:[#allocation2 + $0x40] sm:$0xff]
  %v45 = vld [vmem:[#allocation2 + $0x48] sm:$0xff]
  %v46 = vld [vmem:[#allocation2 + $0x50] sm:$0xff]
  %v47 = vld [vmem:[#allocation2 + $0x58] sm:$0xff]
  %v48 = vld [vmem:[#allocation2 + $0x60] sm:$0xff]
  %v49 = vld [vmem:[#allocation2 + $0x68] sm:$0xff]
  %v50 = vld [vmem:[#allocation2 + $0x70] sm:$0xff]
  %v51 = vld [vmem:[#allocation2 + $0x78] sm:$0xff]
  %v52 = vld [vmem:[%s0] sm:$0xff]
  %v53 = vld [vmem:[%s0 + $0x8] sm:$0xff]
  %v54 = vld [vmem:[%s0 + $0x10] sm:$0xff]
  %v55 = vld [vmem:[%s0 + $0x18] sm:$0xff]
  %v56 = vld [vmem:[%s0 + $0x20] sm:$0xff]
  %v57 = vld [vmem:[%s0 + $0x28] sm:$0xff]
  %v58 = vld [vmem:[%s0 + $0x30] sm:$0xff]
  %v59 = vld [vmem:[%s0 + $0x38] sm:$0xff]
  %v60 = vld [vmem:[%s0 + $0x40] sm:$0xff]
  %v61 = vld [vmem:[%s0 + $0x48] sm:$0xff]
  %v62 = vld [vmem:[%s0 + $0x50] sm:$0xff]
  %v63 = vld [vmem:[%s0 + $0x58] sm:$0xff]
  %v64 = vld [vmem:[%s0 + $0x60] sm:$0xff]
  %v65 = vld [vmem:[%s0 + $0x68] sm:$0xff]
  %v66 = vld [vmem:[%s0 + $0x70] sm:$0xff]
  %v67 = vld [vmem:[%s0 + $0x78] sm:$0xff]
  %v68 = vpack.c.bf16 %v53, %v52
  %v69 = vpack.c.bf16 %v55, %v54
  %v70 = vpack.c.bf16 %v57, %v56
  %v71 = vpack.c.bf16 %v59, %v58
  %v72 = vpack.c.bf16 %v61, %v60
  %v73 = vpack.c.bf16 %v63, %v62
  %v74 = vpack.c.bf16 %v65, %v64
  %v75 = vpack.c.bf16 %v67, %v66
  %v76 = vld [vmem:[%s1] sm:$0xf]
  %v77 = vld [vmem:[%s1 + $0x4] sm:$0xf]
  %v78 = vld [vmem:[%s1 + $0x8] sm:$0xf]
  %v79 = vld [vmem:[%s1 + $0xc] sm:$0xf]
  %v84 = vunpack.c.l.b16 %v76
  %v85 = vunpack.c.l.b16 %v77
  %v86 = vunpack.c.l.b16 %v78
  %v87 = vunpack.c.l.b16 %v79
  %v88 = vpack.c.b16 %v85, %v84
  %v89 = vpack.c.b16 %v87, %v86
  %vm92 = vcmask 261120
  %v94 = vsel %vm92, %v68, 0
  %v97 = vsel %vm92, %v69, 0
  %v100 = vsel %vm92, %v70, 0
  %v103 = vsel %vm92, %v71, 0
  %v106 = vsel %vm92, %v72, 0
  %v109 = vsel %vm92, %v73, 0
  %v112 = vsel %vm92, %v74, 0
  %v115 = vsel %vm92, %v75, 0
  %117 = vmatprep.subr.bf16.mxu0 0
  %118 = vmatpush1.bf16.msra.mxu0 %v88
  %119 = vmatprep.subr.bf16.mxu0 0
  %120 = vmatpush1.bf16.msra.mxu0 %v89
  %121 = vmatprep.subr.bf16.mxu0 0
  %122 = vmatpush1.bf16.msra.mxu0 0
  %123 = vmatprep.subr.bf16.mxu0 0
  %124 = vmatpush1.bf16.msra.mxu0 0
  %125 = vmatprep.subr.bf16.mxu0 0
  %126 = vmatpush1.bf16.msra.mxu0 0
  %127 = vmatprep.subr.bf16.mxu0 0
  %128 = vmatpush1.bf16.msra.mxu0 0
  %129 = vmatprep.subr.bf16.mxu0 0
  %130 = vmatpush1.bf16.msra.mxu0 0
  %131 = vmatprep.subr.bf16.mxu0 0
  %132 = vmatpush1.bf16.msra.mxu0 0
  %133 = vmatprep.subr.bf16.mxu0 0
  %134 = vmatpush1.bf16.msra.mxu0 0
  %135 = vmatprep.subr.bf16.mxu0 0
  %136 = vmatpush1.bf16.msra.mxu0 0
  %137 = vmatprep.subr.bf16.mxu0 0
  %138 = vmatpush1.bf16.msra.mxu0 0
  %139 = vmatprep.subr.bf16.mxu0 0
  %140 = vmatpush1.bf16.msra.mxu0 0
  %141 = vmatprep.subr.bf16.mxu0 0
  %142 = vmatpush1.bf16.msra.mxu0 0
  %143 = vmatprep.subr.bf16.mxu0 0
  %144 = vmatpush1.bf16.msra.mxu0 0
  %145 = vmatprep.subr.bf16.mxu0 0
  %146 = vmatpush1.bf16.msra.mxu0 0
  %147 = vmatprep.subr.bf16.mxu0 0
  %148 = vmatpush1.bf16.msra.mxu0 0
  %149 = vmatprep.mubr.bf16.mxu0 0
  %150 = vmatmul.mubr.bf16.gmra.mrb[0].mxu0 %v94
  %v151 = vpop.f32.mrb[0].mxu0
  %v152 = vadd.f32 0.0, %v151
  %v153 = vpop.f32.mrb[0].mxu0
  %v154 = vpop.f32.mrb[0].mxu0
  %v155 = vadd.f32 0.0, %v154
  %v156 = vpop.f32.mrb[0].mxu0
  %157 = vmatprep.mubr.bf16.mxu0 0
  %158 = vmatmul.mubr.bf16.gmra.mrb[0].mxu0 %v97
  %v159 = vpop.f32.mrb[0].mxu0
  %v160 = vadd.f32 0.0, %v159
  %v161 = vpop.f32.mrb[0].mxu0
  %v162 = vpop.f32.mrb[0].mxu0
  %v163 = vadd.f32 0.0, %v162
  %v164 = vpop.f32.mrb[0].mxu0
  %165 = vmatprep.mubr.bf16.mxu0 0
  %166 = vmatmul.mubr.bf16.gmra.mrb[0].mxu0 %v100
  %v167 = vpop.f32.mrb[0].mxu0
  %v168 = vadd.f32 0.0, %v167
  %v169 = vpop.f32.mrb[0].mxu0
  %v170 = vpop.f32.mrb[0].mxu0
  %v171 = vadd.f32 0.0, %v170
  %v172 = vpop.f32.mrb[0].mxu0
  %173 = vmatprep.mubr.bf16.mxu0 0
  %174 = vmatmul.mubr.bf16.gmra.mrb[0].mxu0 %v103
  %v175 = vpop.f32.mrb[0].mxu0
  %v176 = vadd.f32 0.0, %v175
  %v177 = vpop.f32.mrb[0].mxu0
  %v178 = vpop.f32.mrb[0].mxu0
  %v179 = vadd.f32 0.0, %v178
  %v180 = vpop.f32.mrb[0].mxu0
  %181 = vmatprep.mubr.bf16.mxu0 0
  %182 = vmatmul.mubr.bf16.gmra.mrb[0].mxu0 %v106
  %v183 = vpop.f32.mrb[0].mxu0
  %v184 = vadd.f32 0.0, %v183
  %v185 = vpop.f32.mrb[0].mxu0
  %v186 = vpop.f32.mrb[0].mxu0
  %v187 = vadd.f32 0.0, %v186
  %v188 = vpop.f32.mrb[0].mxu0
  %189 = vmatprep.mubr.bf16.mxu0 0
  %190 = vmatmul.mubr.bf16.gmra.mrb[0].mxu0 %v109
  %v191 = vpop.f32.mrb[0].mxu0
  %v192 = vadd.f32 0.0, %v191
  %v193 = vpop.f32.mrb[0].mxu0
  %v194 = vpop.f32.mrb[0].mxu0
  %v195 = vadd.f32 0.0, %v194
  %v196 = vpop.f32.mrb[0].mxu0
  %197 = vmatprep.mubr.bf16.mxu0 0
  %198 = vmatmul.mubr.bf16.gmra.mrb[0].mxu0 %v112
  %v199 = vpop.f32.mrb[0].mxu0
  %v200 = vadd.f32 0.0, %v199
  %v201 = vpop.f32.mrb[0].mxu0
  %v202 = vpop.f32.mrb[0].mxu0
  %v203 = vadd.f32 0.0, %v202
  %v204 = vpop.f32.mrb[0].mxu0
  %205 = vmatprep.mubr.bf16.mxu0 0
  %206 = vmatmul.mubr.bf16.gmra.mrb[0].mxu0 %v115
  %v207 = vpop.f32.mrb[0].mxu0
  %v208 = vadd.f32 0.0, %v207
  %v209 = vpop.f32.mrb[0].mxu0
  %v210 = vpop.f32.mrb[0].mxu0
  %v211 = vadd.f32 0.0, %v210
  %v212 = vpop.f32.mrb[0].mxu0
  %213 = vdwg.mxu0
  %v214 = vadd.f32 %v36, %v152
  %v215 = vadd.f32 %v37, %v155
  %v216 = vadd.f32 %v38, %v160
  %v217 = vadd.f32 %v39, %v163
  %v218 = vadd.f32 %v40, %v168
  %v219 = vadd.f32 %v41, %v171
  %v220 = vadd.f32 %v42, %v176
  %v221 = vadd.f32 %v43, %v179
  %v222 = vadd.f32 %v44, %v184
  %v223 = vadd.f32 %v45, %v187
  %v224 = vadd.f32 %v46, %v192
  %v225 = vadd.f32 %v47, %v195
  %v226 = vadd.f32 %v48, %v200
  %v227 = vadd.f32 %v49, %v203
  %v228 = vadd.f32 %v50, %v208
  %v229 = vadd.f32 %v51, %v211
  %230 = vst.msk [vmem:[#allocation2] sm:$0xff] %vm92, %v214
  %231 = vst.msk [vmem:[#allocation2 + $0x8] sm:$0xff] %vm92, %v215
  %232 = vst.msk [vmem:[#allocation2 + $0x10] sm:$0xff] %vm92, %v216
  %233 = vst.msk [vmem:[#allocation2 + $0x18] sm:$0xff] %vm92, %v217
  %234 = vst.msk [vmem:[#allocation2 + $0x20] sm:$0xff] %vm92, %v218
  %235 = vst.msk [vmem:[#allocation2 + $0x28] sm:$0xff] %vm92, %v219
  %236 = vst.msk [vmem:[#allocation2 + $0x30] sm:$0xff] %vm92, %v220
  %237 = vst.msk [vmem:[#allocation2 + $0x38] sm:$0xff] %vm92, %v221
  %238 = vst.msk [vmem:[#allocation2 + $0x40] sm:$0xff] %vm92, %v222
  %239 = vst.msk [vmem:[#allocation2 + $0x48] sm:$0xff] %vm92, %v223
  %240 = vst.msk [vmem:[#allocation2 + $0x50] sm:$0xff] %vm92, %v224
  %241 = vst.msk [vmem:[#allocation2 + $0x58] sm:$0xff] %vm92, %v225
  %242 = vst.msk [vmem:[#allocation2 + $0x60] sm:$0xff] %vm92, %v226
  %243 = vst.msk [vmem:[#allocation2 + $0x68] sm:$0xff] %vm92, %v227
  %244 = vst.msk [vmem:[#allocation2 + $0x70] sm:$0xff] %vm92, %v228
  %245 = vst.msk [vmem:[#allocation2 + $0x78] sm:$0xff] %vm92, %v229
  // Predicated region
  $region18: #{tpu_custom_call.1} parent=0 // pred_check
    %p246 = pneg %p15
  $region19: #{tpu_custom_call.1} parent=0 // pred_check_branch
    %248 = sbr.rel (%p246) target = $region21
  $region20: #{tpu_custom_call.1} parent=0 // pred_region
    %v249 = vld [vmem:[#allocation2] sm:$0xff]
    %v250 = vld [vmem:[#allocation2 + $0x8] sm:$0xff]
    %v251 = vld [vmem:[#allocation2 + $0x10] sm:$0xff]
    %v252 = vld [vmem:[#allocation2 + $0x18] sm:$0xff]
    %v253 = vld [vmem:[#allocation2 + $0x20] sm:$0xff]
    %v254 = vld [vmem:[#allocation2 + $0x28] sm:$0xff]
    %v255 = vld [vmem:[#allocation2 + $0x30] sm:$0xff]
    %v256 = vld [vmem:[#allocation2 + $0x38] sm:$0xff]
    %v257 = vld [vmem:[#allocation2 + $0x40] sm:$0xff]
    %v258 = vld [vmem:[#allocation2 + $0x48] sm:$0xff]
    %v259 = vld [vmem:[#allocation2 + $0x50] sm:$0xff]
    %v260 = vld [vmem:[#allocation2 + $0x58] sm:$0xff]
    %v261 = vld [vmem:[#allocation2 + $0x60] sm:$0xff]
    %v262 = vld [vmem:[#allocation2 + $0x68] sm:$0xff]
    %v263 = vld [vmem:[#allocation2 + $0x70] sm:$0xff]
    %v264 = vld [vmem:[#allocation2 + $0x78] sm:$0xff]
    %v265 = vld [vmem:[%s2] sm:$0x1]
    %v267 = vlaneseq
    %v268 = vshrl.u32 %v267, 7
    %v269 = vsub.s32 0, %v268
    %v270 = vrot.slane %v265, %v269
    %v272 = vadd.f32 %v249, %v270
    %v273 = vadd.f32 %v250, %v270
    %v274 = vadd.f32 %v251, %v270
    %v275 = vadd.f32 %v252, %v270
    %v276 = vadd.f32 %v253, %v270
    %v277 = vadd.f32 %v254, %v270
    %v278 = vadd.f32 %v255, %v270
    %v279 = vadd.f32 %v256, %v270
    %v280 = vadd.f32 %v257, %v270
    %v281 = vadd.f32 %v258, %v270
    %v282 = vadd.f32 %v259, %v270
    %v283 = vadd.f32 %v260, %v270
    %v284 = vadd.f32 %v261, %v270
    %v285 = vadd.f32 %v262, %v270
    %v286 = vadd.f32 %v263, %v270
    %v287 = vadd.f32 %v264, %v270
    %v288 = vpack.c.bf16 %v273, %v272
    %v289 = vpack.c.bf16 %v275, %v274
    %v290 = vpack.c.bf16 %v277, %v276
    %v291 = vpack.c.bf16 %v279, %v278
    %v292 = vpack.c.bf16 %v281, %v280
    %v293 = vpack.c.bf16 %v283, %v282
    %v294 = vpack.c.bf16 %v285, %v284
    %v295 = vpack.c.bf16 %v287, %v286
    %v304 = vunpack.c.l.b16 %v288
    %v305 = vunpack.c.h.b16 %v288
    %v306 = vunpack.c.l.b16 %v289
    %v307 = vunpack.c.h.b16 %v289
    %v308 = vunpack.c.l.b16 %v290
    %v309 = vunpack.c.h.b16 %v290
    %v310 = vunpack.c.l.b16 %v291
    %v311 = vunpack.c.h.b16 %v291
    %v312 = vunpack.c.l.b16 %v292
    %v313 = vunpack.c.h.b16 %v292
    %v314 = vunpack.c.l.b16 %v293
    %v315 = vunpack.c.h.b16 %v293
    %v316 = vunpack.c.l.b16 %v294
    %v317 = vunpack.c.h.b16 %v294
    %v318 = vunpack.c.l.b16 %v295
    %v319 = vunpack.c.h.b16 %v295
    %v320 = vpack.c.b16 %v304, %v304
    %v321 = vpack.c.b16 %v305, %v305
    %v322 = vpack.c.b16 %v306, %v306
    %v323 = vpack.c.b16 %v307, %v307
    %v324 = vpack.c.b16 %v308, %v308
    %v325 = vpack.c.b16 %v309, %v309
    %v326 = vpack.c.b16 %v310, %v310
    %v327 = vpack.c.b16 %v311, %v311
    %v328 = vpack.c.b16 %v312, %v312
    %v329 = vpack.c.b16 %v313, %v313
    %v330 = vpack.c.b16 %v314, %v314
    %v331 = vpack.c.b16 %v315, %v315
    %v332 = vpack.c.b16 %v316, %v316
    %v333 = vpack.c.b16 %v317, %v317
    %v334 = vpack.c.b16 %v318, %v318
    %v335 = vpack.c.b16 %v319, %v319
    %vm352 = vcmask 257024
    %353 = vst.msk [vmem:[%s3] sm:$0xf] %vm352, %v320
    %354 = vst.msk [vmem:[%s3 + $0x4] sm:$0xf] %vm352, %v321
    %355 = vst.msk [vmem:[%s3 + $0x8] sm:$0xf] %vm352, %v322
    %356 = vst.msk [vmem:[%s3 + $0xc] sm:$0xf] %vm352, %v323
    %357 = vst.msk [vmem:[%s3 + $0x10] sm:$0xf] %vm352, %v324
    %358 = vst.msk [vmem:[%s3 + $0x14] sm:$0xf] %vm352, %v325
    %359 = vst.msk [vmem:[%s3 + $0x18] sm:$0xf] %vm352, %v326
    %360 = vst.msk [vmem:[%s3 + $0x1c] sm:$0xf] %vm352, %v327
    %361 = vst.msk [vmem:[%s3 + $0x20] sm:$0xf] %vm352, %v328
    %362 = vst.msk [vmem:[%s3 + $0x24] sm:$0xf] %vm352, %v329
    %363 = vst.msk [vmem:[%s3 + $0x28] sm:$0xf] %vm352, %v330
    %364 = vst.msk [vmem:[%s3 + $0x2c] sm:$0xf] %vm352, %v331
    %365 = vst.msk [vmem:[%s3 + $0x30] sm:$0xf] %vm352, %v332
    %366 = vst.msk [vmem:[%s3 + $0x34] sm:$0xf] %vm352, %v333
    %367 = vst.msk [vmem:[%s3 + $0x38] sm:$0xf] %vm352, %v334
    %368 = vst.msk [vmem:[%s3 + $0x3c] sm:$0xf] %vm352, %v335
  $region21: #{tpu_custom_call.1} parent=0 // pred_fallthru
    _
  // Predicated region
  $region22: #{tpu_custom_call.1} parent=0 // pred_check
    _
  $region23: #{tpu_custom_call.1} parent=0 // pred_check_branch
    %370 = sbr.rel (0) target = $region25
  $region24: #{tpu_custom_call.1} parent=0 // pred_region
    _
  $region25: #{tpu_custom_call.1} parent=0 // pred_fallthru
    _
  // Predicated region
  $region26: #{tpu_custom_call.1} parent=0 // pred_check
    _
  $region27: #{tpu_custom_call.1} parent=0 // pred_check_branch
    %372 = sbr.rel (0) target = $region29
  $region28: #{tpu_custom_call.1} parent=0 // pred_region
    _
  $region29: #{tpu_custom_call.1} parent=0 // pred_fallthru
    _

</llo_original>
